<compile_context>
chip_gen: v6e
topology: v6e:2x2x1
jax: 0.10.0
libtpu: 0.0.40
codegen_flags: <defaults>
</compile_context>

<pallas_src>
import jax
import jax.numpy as jnp
from jax.experimental import pallas as pl
from jax.experimental.pallas import tpu as pltpu


def _round_up(x, m):
    return (x + m - 1) // m * m


def _pick_tm(tm, M, Kp, Cp, budget=32 << 20):
    """Largest M-tile (multiple of 8, <= tm) whose double-buffered working set fits."""
    TM = min(tm, _round_up(M, 8))
    TM = _round_up(TM, 8)
    while TM > 8:
        vmem = (2 * TM * Kp * 2          # patches tile, bf16, double-buffered
                + 2 * Kp * Cp * 2        # weights, bf16, double-buffered
                + 2 * TM * Cp * 4)       # pass-2 output tile, f32, double-buffered
        if vmem <= budget:
            break
        TM = max(8, _round_up(TM // 2, 8))
    return TM


# ---------------- pass 1: conv matmul + partial BN sums ----------------
def _stats_kernel(patches_ref, w_ref, s1_ref, s2_ref):
    @pl.when(pl.program_id(0) == 0)
    def _():
        s1_ref[...] = jnp.zeros_like(s1_ref)
        s2_ref[...] = jnp.zeros_like(s2_ref)

    acc = jnp.dot(patches_ref[...], w_ref[...], preferred_element_type=jnp.float32)
    # Cross-sublane reductions run on the XLU (separate slot), hidden under the MXU.
    s1_ref[...] += jnp.sum(acc, axis=0, keepdims=True)
    s2_ref[...] += jnp.sum(acc * acc, axis=0, keepdims=True)


# ---------------- pass 2: conv matmul + BN affine + LeakyReLU ----------------
def _norm_kernel(patches_ref, w_ref, scale_ref, shift_ref, o_ref):
    acc = jnp.dot(patches_ref[...], w_ref[...], preferred_element_type=jnp.float32)
    y = acc * scale_ref[...] + shift_ref[...]
    o_ref[...] = jnp.where(y >= 0.0, y, 0.2 * y)


def cnn_block_forward(x_nchw, conv_w, bn_gamma, bn_beta, stride=2, tm=1024):
    """x_nchw: (N, Cin, H, W); conv_w: (Cout, Cin, 4, 4) PyTorch OIHW layout."""
    N, Cin, H, W = x_nchw.shape
    Cout, _, KH, KW = conv_w.shape
    Ho = (H - KH) // stride + 1
    Wo = (W - KW) // stride + 1
    M = N * Ho * Wo
    K = KH * KW * Cin

    Kp = _round_up(K, 128)        # MXU-full-width contraction dim
    Cp = _round_up(Cout, 128)     # lane-dense output (unmasked vst)
    TM = _pick_tm(tm, M, Kp, Cp)
    Mp = _round_up(M, TM)
    n_m = Mp // TM

    # ---- im2col in NHWC, bf16 feed (halves HBM traffic for patches) ----
    # TODO(synk): build patches per-tile in-kernel via strided DMAs from the NHWC
    # input (memory_space=pl.ANY) to avoid materializing the ~4x im2col in HBM.
    x_nhwc = jnp.transpose(x_nchw, (0, 2, 3, 1)).astype(jnp.bfloat16)
    cols = []
    for kh in range(KH):
        for kw in range(KW):
            cols.append(x_nhwc[:, kh:kh + stride * Ho:stride,
                               kw:kw + stride * Wo:stride, :])    # (N, Ho, Wo, Cin)
    patches = jnp.concatenate(cols, axis=-1).reshape(M, K)
    patches = jnp.pad(patches, ((0, Mp - M), (0, Kp - K)))        # zero-pad rows/cols

    # Flatten weights to (K, Cout) matching (kh, kw, cin) patch ordering; pad + bf16.
    w_mat = jnp.transpose(conv_w, (2, 3, 1, 0)).reshape(K, Cout).astype(jnp.bfloat16)
    w_mat = jnp.pad(w_mat, ((0, Kp - K), (0, Cp - Cout)))

    cparams_acc = pltpu.CompilerParams(
        dimension_semantics=("arbitrary",),       # stats accumulate across M tiles
        vmem_limit_bytes=48 << 20)                # fits v7x 64 MiB with headroom
    cparams_par = pltpu.CompilerParams(
        dimension_semantics=("parallel",),        # independent M tiles (megacore)
        vmem_limit_bytes=48 << 20)

    # ---- pass 1: batch statistics ----
    s1, s2 = pl.pallas_call(
        _stats_kernel,
        out_shape=(jax.ShapeDtypeStruct((1, Cp), jnp.float32),
                   jax.ShapeDtypeStruct((1, Cp), jnp.float32)),
        grid=(n_m,),
        in_specs=[pl.BlockSpec((TM, Kp), lambda i: (i, 0)),
                  pl.BlockSpec((Kp, Cp), lambda i: (0, 0))],      # weight resident
        out_specs=(pl.BlockSpec((1, Cp), lambda i: (0, 0)),
                   pl.BlockSpec((1, Cp), lambda i: (0, 0))),
        compiler_params=cparams_acc,
    )(patches, w_mat)

    # Tiny (1, Cp) f32 math outside the kernels: fold BN into scale/shift.
    # Zero-padded patch rows give exactly-zero conv rows, so summing over Mp rows
    # equals summing over the M valid rows.
    mean = s1 / M
    var = s2 / M - mean * mean                   # biased (PyTorch train-mode norm)
    inv = jax.lax.rsqrt(var + 1e-5)
    gamma = jnp.pad(bn_gamma.astype(jnp.float32), (0, Cp - Cout)).reshape(1, Cp)
    beta = jnp.pad(bn_beta.astype(jnp.float32), (0, Cp - Cout)).reshape(1, Cp)
    scale = gamma * inv
    shift = beta - mean * scale

    # ---- pass 2: normalize + LeakyReLU (recompute matmul, no f32 intermediate in HBM) ----
    out = pl.pallas_call(
        _norm_kernel,
        out_shape=jax.ShapeDtypeStruct((Mp, Cp), jnp.float32),
        grid=(n_m,),
        in_specs=[pl.BlockSpec((TM, Kp), lambda i: (i, 0)),
                  pl.BlockSpec((Kp, Cp), lambda i: (0, 0)),
                  pl.BlockSpec((1, Cp), lambda i: (0, 0)),
                  pl.BlockSpec((1, Cp), lambda i: (0, 0))],
        out_specs=pl.BlockSpec((TM, Cp), lambda i: (i, 0)),
        compiler_params=cparams_par,
    )(patches, w_mat, scale, shift)

    y = out[:M, :Cout].reshape(N, Ho, Wo, Cout)
    # TODO(synk): in a full model keep NHWC end-to-end; the NCHW round-trip is only
    # here to match the PyTorch interface.
    return jnp.transpose(y, (0, 3, 1, 2))


def _reference(x_nchw, conv_w, bn_gamma, bn_beta, stride=2):
    """Pure-JAX reference matching PyTorch forward (train-mode BN), with inputs
    quantized to bf16 to mirror the kernel's MXU feed."""
    x = x_nchw.astype(jnp.bfloat16).astype(jnp.float32)
    w = conv_w.astype(jnp.bfloat16).astype(jnp.float32)
    conv = jax.lax.conv_general_dilated(
        x, w, window_strides=(stride, stride), padding='VALID',
        dimension_numbers=('NCHW', 'OIHW', 'NCHW'))
    mean = jnp.mean(conv, axis=(0, 2, 3), keepdims=True)
    var = jnp.mean((conv - mean) ** 2, axis=(0, 2, 3), keepdims=True)
    y = (conv - mean) * jax.lax.rsqrt(var + 1e-5)
    y = y * bn_gamma[None, :, None, None] + bn_beta[None, :, None, None]
    return jnp.where(y >= 0.0, y, 0.2 * y)


if __name__ == "__main__":
    key = jax.random.PRNGKey(0)
    kx, kw, kg, kb = jax.random.split(key, 4)

    N, Cin, H, W = 2, 4, 16, 16
    Cout, stride = 8, 2

    x = jax.random.normal(kx, (N, Cin, H, W), dtype=jnp.float32)
    conv_w = 0.1 * jax.random.normal(kw, (Cout, Cin, 4, 4), dtype=jnp.float32)
    bn_gamma = 1.0 + 0.1 * jax.random.normal(kg, (Cout,), dtype=jnp.float32)
    bn_beta = 0.1 * jax.random.normal(kb, (Cout,), dtype=jnp.float32)

    out = cnn_block_forward(x, conv_w, bn_gamma, bn_beta, stride=stride)
    out = jax.block_until_ready(out)

    ref = _reference(x, conv_w, bn_gamma, bn_beta, stride=stride)
    Ho = (H - 4) // stride + 1
    Wo = (W - 4) // stride + 1
    assert out.shape == (N, Cout, Ho, Wo)
    assert jnp.allclose(out, ref, rtol=5e-3, atol=5e-3), "mismatch vs reference"

    print("KERNEL_OK")
</pallas_src>

<mosaic_0001>
module attributes {stable_mosaic.version = 11 : i64} {
  func.func @_stats_kernel(%arg0: i32, %arg1: memref<104x128xbf16, #tpu.memory_space<vmem>>, %arg2: memref<128x128xbf16, #tpu.memory_space<vmem>>, %arg3: memref<1x128xf32, #tpu.memory_space<vmem>>, %arg4: memref<1x128xf32, #tpu.memory_space<vmem>>) attributes {dimension_semantics = [#tpu.dimension_semantics<arbitrary>], iteration_bounds = array<i64: 1>, scalar_prefetch = 0 : i64, scratch_operands = 0 : i64, tpu.core_type = #tpu.core_type<tc>, window_params = [{transform_indices = @transform_0, window_bounds = array<i64: 104, 128>}, {pipeline_mode = #tpu.pipeline_mode<synchronous>, transform_indices = @transform_1, window_bounds = array<i64: 128, 128>}, {pipeline_mode = #tpu.pipeline_mode<synchronous>, transform_indices = @transform_2, window_bounds = array<i64: 1, 128>}, {pipeline_mode = #tpu.pipeline_mode<synchronous>, transform_indices = @transform_3, window_bounds = array<i64: 1, 128>}]} {
    %c0_i32 = arith.constant 0 : i32
    %0 = arith.cmpi eq, %arg0, %c0_i32 : i32
    %1 = arith.extui %0 : i1 to i32
    %c0_i32_0 = arith.constant 0 : i32
    %2 = arith.cmpi ne, %1, %c0_i32_0 : i32
    scf.if %2 {
      %cst_14 = arith.constant 0.000000e+00 : f32
      %17 = vector.broadcast %cst_14 : f32 to vector<1x128xf32>
      %c0_15 = arith.constant 0 : index
      %c0_16 = arith.constant 0 : index
      %18 = vector.load %arg3[%c0_15, %c0_16] : memref<1x128xf32, #tpu.memory_space<vmem>>, vector<1x128xf32>
      tpu.vector_store %arg3[%c0_15, %c0_16], %17 {strides = array<i32>} : memref<1x128xf32, #tpu.memory_space<vmem>>, vector<1x128xf32>,
      %cst_17 = arith.constant 0.000000e+00 : f32
      %19 = vector.broadcast %cst_17 : f32 to vector<1x128xf32>
      %c0_18 = arith.constant 0 : index
      %c0_19 = arith.constant 0 : index
      %20 = vector.load %arg4[%c0_18, %c0_19] : memref<1x128xf32, #tpu.memory_space<vmem>>, vector<1x128xf32>
      tpu.vector_store %arg4[%c0_18, %c0_19], %19 {strides = array<i32>} : memref<1x128xf32, #tpu.memory_space<vmem>>, vector<1x128xf32>,
    } else {
    }
    %c0 = arith.constant 0 : index
    %c0_1 = arith.constant 0 : index
    %3 = vector.load %arg1[%c0, %c0_1] : memref<104x128xbf16, #tpu.memory_space<vmem>>, vector<104x128xbf16>
    %c0_2 = arith.constant 0 : index
    %c0_3 = arith.constant 0 : index
    %4 = vector.load %arg2[%c0_2, %c0_3] : memref<128x128xbf16, #tpu.memory_space<vmem>>, vector<128x128xbf16>
    %cst = arith.constant dense<0.000000e+00> : vector<104x128xf32>
    %5 = tpu.matmul %3, %4, %cst {dimension_numbers = #tpu.dot_dimension_numbers<[1], [0], [0], [1], [0, 0, 1, 1], [], []>} : vector<104x128xbf16>, vector<128x128xbf16>, vector<104x128xf32> -> vector<104x128xf32>
    %c0_4 = arith.constant 0 : index
    %c0_5 = arith.constant 0 : index
    %6 = vector.load %arg3[%c0_4, %c0_5] : memref<1x128xf32, #tpu.memory_space<vmem>>, vector<1x128xf32>
    %cst_6 = arith.constant dense<0.000000e+00> : vector<128xf32>
    %7 = vector.multi_reduction <add>, %5, %cst_6 [0] : vector<104x128xf32> to vector<128xf32>
    %8 = vector.shape_cast %7 : vector<128xf32> to vector<1x128xf32>
    %9 = arith.addf %6, %8 : vector<1x128xf32>
    %c0_7 = arith.constant 0 : index
    %c0_8 = arith.constant 0 : index
    %10 = vector.load %arg3[%c0_7, %c0_8] : memref<1x128xf32, #tpu.memory_space<vmem>>, vector<1x128xf32>
    tpu.vector_store %arg3[%c0_7, %c0_8], %9 {strides = array<i32>} : memref<1x128xf32, #tpu.memory_space<vmem>>, vector<1x128xf32>,
    %c0_9 = arith.constant 0 : index
    %c0_10 = arith.constant 0 : index
    %11 = vector.load %arg4[%c0_9, %c0_10] : memref<1x128xf32, #tpu.memory_space<vmem>>, vector<1x128xf32>
    %12 = arith.mulf %5, %5 : vector<104x128xf32>
    %cst_11 = arith.constant dense<0.000000e+00> : vector<128xf32>
    %13 = vector.multi_reduction <add>, %12, %cst_11 [0] : vector<104x128xf32> to vector<128xf32>
    %14 = vector.shape_cast %13 : vector<128xf32> to vector<1x128xf32>
    %15 = arith.addf %11, %14 : vector<1x128xf32>
    %c0_12 = arith.constant 0 : index
    %c0_13 = arith.constant 0 : index
    %16 = vector.load %arg4[%c0_12, %c0_13] : memref<1x128xf32, #tpu.memory_space<vmem>>, vector<1x128xf32>
    tpu.vector_store %arg4[%c0_12, %c0_13], %15 {strides = array<i32>} : memref<1x128xf32, #tpu.memory_space<vmem>>, vector<1x128xf32>,
    return
  }
  func.func @transform_0(%arg0: i32) -> (i32, i32) {
    %c0_i32 = arith.constant 0 : i32
    %c0_i32_0 = arith.constant 0 : i32
    return %arg0, %c0_i32 : i32, i32
  }
  func.func @transform_1(%arg0: i32) -> (i32, i32) {
    %c0_i32 = arith.constant 0 : i32
    %c0_i32_0 = arith.constant 0 : i32
    %c0_i32_1 = arith.constant 0 : i32
    return %c0_i32, %c0_i32_0 : i32, i32
  }
  func.func @transform_2(%arg0: i32) -> (i32, i32) {
    %c0_i32 = arith.constant 0 : i32
    %c0_i32_0 = arith.constant 0 : i32
    %c0_i32_1 = arith.constant 0 : i32
    return %c0_i32, %c0_i32_0 : i32, i32
  }
  func.func @transform_3(%arg0: i32) -> (i32, i32) {
    %c0_i32 = arith.constant 0 : i32
    %c0_i32_0 = arith.constant 0 : i32
    %c0_i32_1 = arith.constant 0 : i32
    return %c0_i32, %c0_i32_0 : i32, i32
  }
}

</mosaic_0001>

<llo_original>
// kernel: tpu_custom_call.1
$region0: #{tpu_custom_call.1}
  #allocation0 [shape = 'u32[]', space=smem, size = 0x4, offset = 0x4, fixed_abs, tag = 'smem constant byte address 0x4 - core index']
  #allocation1 [shape = 'u32[144,128]{1,0:T(1,128)}', space=vmem, size = 0x12000, scoped, tag = 'internal scratch']
  %s0 = inlined_call_operand.hbm [shape: bf16[104,128], index: 0, kind: input, shape index: {}]
  %s1 = inlined_call_operand.hbm [shape: bf16[128,128], index: 1, kind: input, shape index: {}]
  %s2 = inlined_call_operand.hbm [shape: f32[1,128], index: 2, kind: output, shape index: {0}]
  %s3 = inlined_call_operand.hbm [shape: f32[1,128], index: 3, kind: output, shape index: {1}]
  %4 = xla_tuple %s2, %s3
  %s5 = sld [smem:[#allocation0]]
  $region38: #{tpu_custom_call.1} parent=0
    _
  %s7 = ssub.s32 1, %s5
  %s8 = scalar_select 0, %s7, %s5
  $region1: #{tpu_custom_call.1} parent=0
    #allocation2 [shape = 'u8[26624]{0}', space=vmem, size = 0x6800, scoped, tag = 'input window, operand 0, single buffered']
    #allocation3 [shape = 's32[1]{0}', space=sflag, size = 0x4, scoped, tag = 'scoped memory for tpu_custom_call.1']
    #allocation4 [shape = 's32[1]{0}', space=sflag, size = 0x4, scoped, tag = 'scoped memory for tpu_custom_call.1']
    #allocation5 [shape = 'u8[32768]{0}', space=vmem, size = 0x8000, scoped, tag = 'input window, operand 1, single buffered']
    #allocation6 [shape = 's32[1]{0}', space=sflag, size = 0x4, scoped, tag = 'scoped memory for tpu_custom_call.1']
    #allocation7 [shape = 'u8[512]{0}', space=vmem, size = 0x400, scoped, tag = 'output window, operand 0, single buffered']
    #allocation8 [shape = 'u8[512]{0}', space=vmem, size = 0x400, scoped, tag = 'output window, operand 1, single buffered']
    #allocation9 [shape = 's32[1]{0}', space=sflag, size = 0x4, scoped, tag = 'scoped memory for tpu_custom_call.1']
    %9 = vsyncpa [#allocation3], 0
    %10 = vsyncpa [#allocation6], 0
    %11 = vsyncpa [#allocation4], 0
    %12 = vsyncpa [#allocation9], 0
    // Predicated region
    $region2: #{tpu_custom_call.1} parent=1 // pred_check
      _
    $region3: #{tpu_custom_call.1} parent=1 // pred_check_branch
      %14 = sbr.rel (0) target = $region5
    $region4: #{tpu_custom_call.1} parent=1 // pred_region
      %s16 = ssub.s32 832, 832
      %17 = vsyncadd [#allocation3], %s16
      %s18 = sshll.u32 [#allocation2], 4
      %s19 = int_to_ptr.vmem [resolvable:$true] %s18
      %24 = dma.hbm_to_vmem [thread:$0]  %s0, 832, %s19, [#allocation3], 64, 64, 4
    $region5: #{tpu_custom_call.1} parent=1 // pred_fallthru
      _
    // Predicated region
    $region6: #{tpu_custom_call.1} parent=1 // pred_check
      _
    $region7: #{tpu_custom_call.1} parent=1 // pred_check_branch
      %26 = sbr.rel (0) target = $region9
    $region8: #{tpu_custom_call.1} parent=1 // pred_region
      %s28 = ssub.s32 1024, 1024
      %29 = vsyncadd [#allocation6], %s28
      %s30 = sshll.u32 [#allocation5], 4
      %s31 = int_to_ptr.vmem [resolvable:$true] %s30
      %36 = dma.hbm_to_vmem [thread:$0]  %s1, 1024, %s31, [#allocation6], 64, 64, 4
    $region9: #{tpu_custom_call.1} parent=1 // pred_fallthru
      _
    // Predicated region
    $region10: #{tpu_custom_call.1} parent=1 // pred_check
      _
    $region11: #{tpu_custom_call.1} parent=1 // pred_check_branch
      %38 = sbr.rel (0) target = $region13
    $region12: #{tpu_custom_call.1} parent=1 // pred_region
      %39 = dma.done [#allocation3], 832
    $region13: #{tpu_custom_call.1} parent=1 // pred_fallthru
      _
    // Predicated region
    $region14: #{tpu_custom_call.1} parent=1 // pred_check
      _
    $region15: #{tpu_custom_call.1} parent=1 // pred_check_branch
      %41 = sbr.rel (0) target = $region17
    $region16: #{tpu_custom_call.1} parent=1 // pred_region
      %42 = dma.done [#allocation6], 1024
    $region17: #{tpu_custom_call.1} parent=1 // pred_fallthru
      _
    %p44 = scmp.eq.s32.totalorder 0, 0
    // Predicated region
    $region18: #{tpu_custom_call.1} parent=1 // pred_check
      %p45 = pneg %p44
    $region19: #{tpu_custom_call.1} parent=1 // pred_check_branch
      %47 = sbr.rel (%p45) target = $region21
    $region20: #{tpu_custom_call.1} parent=1 // pred_region
      %48 = vst [vmem:[#allocation7] sm:$0x1] 0.0
      %49 = vst [vmem:[#allocation8] sm:$0x1] 0.0
    $region21: #{tpu_custom_call.1} parent=1 // pred_fallthru
      _
    %v50 = vld [vmem:[#allocation2] sm:$0xf]
    %v51 = vld [vmem:[#allocation2 + $0x4] sm:$0xf]
    %v52 = vld [vmem:[#allocation2 + $0x8] sm:$0xf]
    %v53 = vld [vmem:[#allocation2 + $0xc] sm:$0xf]
    %v54 = vld [vmem:[#allocation2 + $0x10] sm:$0xf]
    %v55 = vld [vmem:[#allocation2 + $0x14] sm:$0xf]
    %v56 = vld [vmem:[#allocation2 + $0x18] sm:$0xf]
    %v57 = vld [vmem:[#allocation2 + $0x1c] sm:$0xf]
    %v58 = vld [vmem:[#allocation2 + $0x20] sm:$0xf]
    %v59 = vld [vmem:[#allocation2 + $0x24] sm:$0xf]
    %v60 = vld [vmem:[#allocation2 + $0x28] sm:$0xf]
    %v61 = vld [vmem:[#allocation2 + $0x2c] sm:$0xf]
    %v62 = vld [vmem:[#allocation2 + $0x30] sm:$0xf]
    %v63 = vld [vmem:[#allocation5] sm:$0xf]
    %v64 = vld [vmem:[#allocation5 + $0x4] sm:$0xf]
    %v65 = vld [vmem:[#allocation5 + $0x8] sm:$0xf]
    %v66 = vld [vmem:[#allocation5 + $0xc] sm:$0xf]
    %v67 = vld [vmem:[#allocation5 + $0x10] sm:$0xf]
    %v68 = vld [vmem:[#allocation5 + $0x14] sm:$0xf]
    %v69 = vld [vmem:[#allocation5 + $0x18] sm:$0xf]
    %v70 = vld [vmem:[#allocation5 + $0x1c] sm:$0xf]
    %v71 = vld [vmem:[#allocation5 + $0x20] sm:$0xf]
    %v72 = vld [vmem:[#allocation5 + $0x24] sm:$0xf]
    %v73 = vld [vmem:[#allocation5 + $0x28] sm:$0xf]
    %v74 = vld [vmem:[#allocation5 + $0x2c] sm:$0xf]
    %v75 = vld [vmem:[#allocation5 + $0x30] sm:$0xf]
    %v76 = vld [vmem:[#allocation5 + $0x34] sm:$0xf]
    %v77 = vld [vmem:[#allocation5 + $0x38] sm:$0xf]
    %v78 = vld [vmem:[#allocation5 + $0x3c] sm:$0xf]
    %v92 = vunpack.c.l.b16 %v50
    %v93 = vunpack.c.l.b16 %v51
    %v94 = vunpack.c.l.b16 %v52
    %v95 = vunpack.c.l.b16 %v53
    %v96 = vunpack.c.l.b16 %v54
    %v97 = vunpack.c.l.b16 %v55
    %v98 = vunpack.c.l.b16 %v56
    %v99 = vunpack.c.l.b16 %v57
    %v100 = vunpack.c.l.b16 %v58
    %v101 = vunpack.c.l.b16 %v59
    %v102 = vunpack.c.l.b16 %v60
    %v103 = vunpack.c.l.b16 %v61
    %v104 = vunpack.c.l.b16 %v62
    %v105 = vpack.c.b16 %v93, %v92
    %v106 = vpack.c.b16 %v95, %v94
    %v107 = vpack.c.b16 %v97, %v96
    %v108 = vpack.c.b16 %v99, %v98
    %v109 = vpack.c.b16 %v101, %v100
    %v110 = vpack.c.b16 %v103, %v102
    %v111 = vpack.c.b16 %v104, %v104
    %v135 = vunpack.c.l.b16 %v63
    %v136 = vunpack.c.l.b16 %v64
    %v137 = vunpack.c.l.b16 %v65
    %v138 = vunpack.c.l.b16 %v66
    %v139 = vunpack.c.l.b16 %v67
    %v140 = vunpack.c.l.b16 %v68
    %v141 = vunpack.c.l.b16 %v69
    %v142 = vunpack.c.l.b16 %v70
    %v143 = vunpack.c.l.b16 %v71
    %v144 = vunpack.c.l.b16 %v72
    %v145 = vunpack.c.l.b16 %v73
    %v146 = vunpack.c.l.b16 %v74
    %v147 = vunpack.c.l.b16 %v75
    %v148 = vunpack.c.l.b16 %v76
    %v149 = vunpack.c.l.b16 %v77
    %v150 = vunpack.c.l.b16 %v78
    %v151 = vpack.c.b16 %v136, %v135
    %v152 = vpack.c.b16 %v138, %v137
    %v153 = vpack.c.b16 %v140, %v139
    %v154 = vpack.c.b16 %v142, %v141
    %v155 = vpack.c.b16 %v144, %v143
    %v156 = vpack.c.b16 %v146, %v145
    %v157 = vpack.c.b16 %v148, %v147
    %v158 = vpack.c.b16 %v150, %v149
    %167 = vmatprep.subr.bf16.mxu0 0
    %168 = vmatpush1.bf16.msra.mxu0 %v158
    %169 = vmatprep.subr.bf16.mxu0 0
    %170 = vmatpush1.bf16.msra.mxu0 %v157
    %171 = vmatprep.subr.bf16.mxu0 0
    %172 = vmatpush1.bf16.msra.mxu0 %v156
    %173 = vmatprep.subr.bf16.mxu0 0
    %174 = vmatpush1.bf16.msra.mxu0 %v155
    %175 = vmatprep.subr.bf16.mxu0 0
    %176 = vmatpush1.bf16.msra.mxu0 %v154
    %177 = vmatprep.subr.bf16.mxu0 0
    %178 = vmatpush1.bf16.msra.mxu0 %v153
    %179 = vmatprep.subr.bf16.mxu0 0
    %180 = vmatpush1.bf16.msra.mxu0 %v152
    %181 = vmatprep.subr.bf16.mxu0 0
    %182 = vmatpush1.bf16.msra.mxu0 %v151
    %183 = vmatprep.subr.bf16.mxu0 0
    %184 = vmatpush2.bf16.msra.mxu0 0
    %185 = vmatprep.subr.bf16.mxu0 0
    %186 = vmatpush2.bf16.msra.mxu0 0
    %187 = vmatprep.subr.bf16.mxu0 0
    %188 = vmatpush2.bf16.msra.mxu0 0
    %189 = vmatprep.subr.bf16.mxu0 0
    %190 = vmatpush2.bf16.msra.mxu0 0
    %191 = vmatprep.subr.bf16.mxu0 0
    %192 = vmatpush2.bf16.msra.mxu0 0
    %193 = vmatprep.subr.bf16.mxu0 0
    %194 = vmatpush2.bf16.msra.mxu0 0
    %195 = vmatprep.subr.bf16.mxu0 0
    %196 = vmatpush2.bf16.msra.mxu0 0
    %197 = vmatprep.subr.bf16.mxu0 0
    %198 = vmatpush2.bf16.msra.mxu0 0
    %199 = vmatprep.mubr.bf16.mxu0 0
    %200 = vmatmul.mubr.bf16.gmra.mxu0 %v105
    %v201 = vpop.f32.mrf.mxu0
    %v202 = vadd.f32 0.0, %v201
    %v203 = vpop.f32.mrf.mxu0
    %v204 = vpop.f32.mrf.mxu0
    %v205 = vadd.f32 0.0, %v204
    %v206 = vpop.f32.mrf.mxu0
    %207 = vmatprep.mubr.bf16.mxu0 0
    %208 = vmatmul.mubr.bf16.gmra.mxu0 %v106
    %v209 = vpop.f32.mrf.mxu0
    %v210 = vadd.f32 0.0, %v209
    %v211 = vpop.f32.mrf.mxu0
    %v212 = vpop.f32.mrf.mxu0
    %v213 = vadd.f32 0.0, %v212
    %v214 = vpop.f32.mrf.mxu0
    %215 = vmatprep.mubr.bf16.mxu0 0
    %216 = vmatmul.mubr.bf16.gmra.mxu0 %v107
    %v217 = vpop.f32.mrf.mxu0
    %v218 = vadd.f32 0.0, %v217
    %v219 = vpop.f32.mrf.mxu0
    %v220 = vpop.f32.mrf.mxu0
    %v221 = vadd.f32 0.0, %v220
    %v222 = vpop.f32.mrf.mxu0
    %223 = vmatprep.mubr.bf16.mxu0 0
    %224 = vmatmul.mubr.bf16.gmra.mxu0 %v108
    %v225 = vpop.f32.mrf.mxu0
    %v226 = vadd.f32 0.0, %v225
    %v227 = vpop.f32.mrf.mxu0
    %v228 = vpop.f32.mrf.mxu0
    %v229 = vadd.f32 0.0, %v228
    %v230 = vpop.f32.mrf.mxu0
    %231 = vmatprep.mubr.bf16.mxu0 0
    %232 = vmatmul.mubr.bf16.gmra.mxu0 %v109
    %v233 = vpop.f32.mrf.mxu0
    %v234 = vadd.f32 0.0, %v233
    %v235 = vpop.f32.mrf.mxu0
    %v236 = vpop.f32.mrf.mxu0
    %v237 = vadd.f32 0.0, %v236
    %v238 = vpop.f32.mrf.mxu0
    %239 = vmatprep.mubr.bf16.mxu0 0
    %240 = vmatmul.mubr.bf16.gmra.mxu0 %v110
    %v241 = vpop.f32.mrf.mxu0
    %v242 = vadd.f32 0.0, %v241
    %v243 = vpop.f32.mrf.mxu0
    %v244 = vpop.f32.mrf.mxu0
    %v245 = vadd.f32 0.0, %v244
    %v246 = vpop.f32.mrf.mxu0
    %247 = vmatprep.mubr.bf16.mxu0 0
    %248 = vmatmul.mubr.bf16.gmra.mxu0 %v111
    %v249 = vpop.f32.mrf.mxu0
    %v250 = vadd.f32 0.0, %v249
    %v251 = vpop.f32.mrf.mxu0
    %v252 = vpop.f32.mrf.mxu0
    %v253 = vpop.f32.mrf.mxu0
    %254 = vdwg.mxu0
    %v255 = vld [vmem:[#allocation7] sm:$0x1]
    %v256 = vadd.f32 %v202, %v205
    %v257 = vadd.f32 %v256, %v210
    %v258 = vadd.f32 %v257, %v213
    %v259 = vadd.f32 %v258, %v218
    %v260 = vadd.f32 %v259, %v221
    %v261 = vadd.f32 %v260, %v226
    %v262 = vadd.f32 %v261, %v229
    %v263 = vadd.f32 %v262, %v234
    %v264 = vadd.f32 %v263, %v237
    %v265 = vadd.f32 %v264, %v242
    %v266 = vadd.f32 %v265, %v245
    %v267 = vadd.f32 %v266, %v250
    %v268 = vrot.slane %v267, 4
    %v269 = vadd.f32 %v267, %v268
    %v270 = vrot.slane %v269, 2
    %v271 = vadd.f32 %v269, %v270
    %v272 = vrot.slane %v271, 1
    %v273 = vadd.f32 %v271, %v272
    %v274 = vadd.f32 %v255, %v273
    %275 = vst [vmem:[#allocation7] sm:$0x1] %v274
    %v276 = vld [vmem:[#allocation8] sm:$0x1]
    %v277 = vmul.f32 %v202, %v202
    %v278 = vmul.f32 %v205, %v205
    %v279 = vmul.f32 %v210, %v210
    %v280 = vmul.f32 %v213, %v213
    %v281 = vmul.f32 %v218, %v218
    %v282 = vmul.f32 %v221, %v221
    %v283 = vmul.f32 %v226, %v226
    %v284 = vmul.f32 %v229, %v229
    %v285 = vmul.f32 %v234, %v234
    %v286 = vmul.f32 %v237, %v237
    %v287 = vmul.f32 %v242, %v242
    %v288 = vmul.f32 %v245, %v245
    %v289 = vmul.f32 %v250, %v250
    %v290 = vadd.f32 %v277, %v278
    %v291 = vadd.f32 %v290, %v279
    %v292 = vadd.f32 %v291, %v280
    %v293 = vadd.f32 %v292, %v281
    %v294 = vadd.f32 %v293, %v282
    %v295 = vadd.f32 %v294, %v283
    %v296 = vadd.f32 %v295, %v284
    %v297 = vadd.f32 %v296, %v285
    %v298 = vadd.f32 %v297, %v286
    %v299 = vadd.f32 %v298, %v287
    %v300 = vadd.f32 %v299, %v288
    %v301 = vadd.f32 %v300, %v289
    %v302 = vrot.slane %v301, 4
    %v303 = vadd.f32 %v301, %v302
    %v304 = vrot.slane %v303, 2
    %v305 = vadd.f32 %v303, %v304
    %v306 = vrot.slane %v305, 1
    %v307 = vadd.f32 %v305, %v306
    %v308 = vadd.f32 %v276, %v307
    %309 = vst [vmem:[#allocation8] sm:$0x1] %v308
    // Predicated region
    $region22: #{tpu_custom_call.1} parent=1 // pred_check
      _
    $region23: #{tpu_custom_call.1} parent=1 // pred_check_branch
      %311 = sbr.rel (0) target = $region25
    $region24: #{tpu_custom_call.1} parent=1 // pred_region
      %s313 = ssub.s32 16, 16
      %314 = vsyncadd [#allocation4], %s313
      %s316 = sshll.u32 [#allocation7], 4
      %s317 = int_to_ptr.vmem [resolvable:$true] %s316
      %319 = dma.vmem_to_hbm [thread:$0]  %s317, 16, %s2, [#allocation4]
    $region25: #{tpu_custom_call.1} parent=1 // pred_fallthru
      _
    // Predicated region
    $region26: #{tpu_custom_call.1} parent=1 // pred_check
      _
    $region27: #{tpu_custom_call.1} parent=1 // pred_check_branch
      %321 = sbr.rel (0) target = $region29
    $region28: #{tpu_custom_call.1} parent=1 // pred_region
      %s323 = ssub.s32 16, 16
      %324 = vsyncadd [#allocation9], %s323
      %s326 = sshll.u32 [#allocation8], 4
      %s327 = int_to_ptr.vmem [resolvable:$true] %s326
      %329 = dma.vmem_to_hbm [thread:$0]  %s327, 16, %s3, [#allocation9]
    $region29: #{tpu_custom_call.1} parent=1 // pred_fallthru
      _
    // Predicated region
    $region30: #{tpu_custom_call.1} parent=1 // pred_check
      _
    $region31: #{tpu_custom_call.1} parent=1 // pred_check_branch
      %331 = sbr.rel (0) target = $region33
    $region32: #{tpu_custom_call.1} parent=1 // pred_region
      %332 = dma.done [#allocation4], 16
    $region33: #{tpu_custom_call.1} parent=1 // pred_fallthru
      _
    // Predicated region
    $region34: #{tpu_custom_call.1} parent=1 // pred_check
      _
    $region35: #{tpu_custom_call.1} parent=1 // pred_check_branch
      %334 = sbr.rel (0) target = $region37
    $region36: #{tpu_custom_call.1} parent=1 // pred_region
      %335 = dma.done [#allocation9], 16
    $region37: #{tpu_custom_call.1} parent=1 // pred_fallthru
      _
    %336 = vsyncpa [#allocation3], 1
    %337 = vsyncpa [#allocation6], 1
    %338 = vsyncpa [#allocation4], 1
    %339 = vsyncpa [#allocation9], 1

</llo_original>
